<compile_context>
chip_gen: v5e
topology: v5e:2x2
jax: 0.10.0
libtpu: 0.0.40
codegen_flags: <defaults>
</compile_context>

<pallas_src>
import functools

import jax
import jax.numpy as jnp
from jax import lax
from jax.experimental import pallas as pl
from jax.experimental.pallas import tpu as pltpu

_LANE = 128
_MAX_TC = 4096              # max lanes per column tile
_TILE_BYTES = 2 << 20       # ~2 MiB per input tile buffer


def _cdiv(a, b):
    return -(-a // b)


def _ceil_to(x, m):
    return _cdiv(x, m) * m


# ---------------------------------------------------------------------------
# Single-column-tile path (H*W fits in one lane tile): no scratch accumulators,
# exact two-pass denominator, reductions straight from live vregs.
# ---------------------------------------------------------------------------
def _nse_single_kernel(pred_ref, tgt_ref, part_ref, *, cols, inv_cols):
    t = tgt_ref[...].astype(jnp.float32)
    p = pred_ref[...].astype(jnp.float32)

    d = t - p
    num_partial = jnp.sum(d * d)

    # Two-pass denominator: padded lanes are zero, so the row sum is exact.
    row_sums = jnp.sum(t, axis=1, keepdims=True)          # (tr, 1)
    mean = row_sums * inv_cols                            # true-column mean
    ts = t - mean
    if cols != t.shape[1]:
        # Zero-padded lanes would contribute (-mean)^2; mask them out.
        lane = lax.broadcasted_iota(jnp.int32, t.shape, 1)
        ts = jnp.where(lane < cols, ts, 0.0)
    den_partial = jnp.sum(ts * ts)

    part_ref[0:1, 0:1, :] = jnp.full((1, 1, _LANE), num_partial, jnp.float32)
    part_ref[0:1, 1:2, :] = jnp.full((1, 1, _LANE), den_partial, jnp.float32)


# ---------------------------------------------------------------------------
# Multi-column-tile path: fold each per-step product across static 128-lane
# groups in-register, then a single RMW of (tr, 128) accumulators per step.
# ---------------------------------------------------------------------------
def _nse_multi_kernel(pred_ref, tgt_ref, part_ref, num_acc, t_acc, t2_acc, *,
                      inv_cols):
    j = pl.program_id(1)
    tc = tgt_ref.shape[1]
    groups = tc // _LANE

    num_f = t_f = t2_f = None
    for l in range(groups):                       # static, lane-aligned slices
        sl = slice(l * _LANE, (l + 1) * _LANE)
        t_l = tgt_ref[:, sl].astype(jnp.float32)
        p_l = pred_ref[:, sl].astype(jnp.float32)
        d_l = t_l - p_l
        if l == 0:
            num_f, t_f, t2_f = d_l * d_l, t_l, t_l * t_l
        else:
            num_f = num_f + d_l * d_l
            t_f = t_f + t_l
            t2_f = t2_f + t_l * t_l

    @pl.when(j == 0)
    def _():
        num_acc[...] = num_f
        t_acc[...] = t_f
        t2_acc[...] = t2_f

    @pl.when(j != 0)
    def _():
        num_acc[...] += num_f
        t_acc[...] += t_f
        t2_acc[...] += t2_f

    # Finalize once per row tile: small (tr, 128) reduces + one-pass identity.
    # (f32 identity can cancel when |mean| >> std per row; acceptable here.)
    @pl.when(j == pl.num_programs(1) - 1)
    def _():
        num_partial = jnp.sum(num_acc[...])
        row_sums = jnp.sum(t_acc[...], axis=1, keepdims=True)      # (tr, 1)
        den_partial = (jnp.sum(t2_acc[...])
                       - jnp.sum(row_sums * row_sums) * inv_cols)
        part_ref[0:1, 0:1, :] = jnp.full((1, 1, _LANE), num_partial, jnp.float32)
        part_ref[0:1, 1:2, :] = jnp.full((1, 1, _LANE), den_partial, jnp.float32)


def _choose_tiles(rows, cols, itemsize):
    # Column (lane) tiling: multiples of 128, capped at _MAX_TC lanes.
    cols128 = _ceil_to(cols, _LANE)
    nct = _cdiv(cols128, _MAX_TC)
    tc = _cdiv(cols128 // _LANE, nct) * _LANE
    cols_pad = tc * nct

    # Row (sublane) tiling: ~_TILE_BYTES per input tile, itemsize-aware,
    # aligned to the dtype's sublane packing.
    row_align = max(8, 32 // itemsize)        # 8 for f32, 16 for bf16, 32 for i8
    rows_a = _ceil_to(rows, row_align)
    max_tr = max(row_align,
                 (_TILE_BYTES // (tc * itemsize)) // row_align * row_align)
    nrt = _cdiv(rows_a, max_tr)
    # v7x has 2 TensorCores splitting the "parallel" row axis: prefer >= 2 row
    # tiles whenever there are enough rows (no-op on the 1-TC v5e / v6e).
    if nrt == 1 and rows_a >= 2 * row_align:
        nrt = 2
    tr = _cdiv(rows_a // row_align, nrt) * row_align
    rows_pad = tr * nrt
    return tr, tc, rows_pad, cols_pad, nrt, nct


def nse_loss(output, target):
    assert output.shape == target.shape
    N, C, H, W = target.shape
    rows, cols = N * C, H * W

    pred2d = output.reshape(rows, cols)
    tgt2d = target.reshape(rows, cols)

    itemsize = jnp.dtype(target.dtype).itemsize
    tr, tc, rows_pad, cols_pad, nrt, nct = _choose_tiles(rows, cols, itemsize)

    # Zero-pad to tile multiples; padded rows/cols contribute 0 to every sum.
    if rows_pad != rows or cols_pad != cols:
        pad = ((0, rows_pad - rows), (0, cols_pad - cols))
        pred2d = jnp.pad(pred2d, pad)
        tgt2d = jnp.pad(tgt2d, pad)

    # Explicit VMEM budget: double-buffered inputs + folded accumulators + out.
    vmem_need = (2 * 2 * tr * tc * itemsize
                 + 3 * tr * _LANE * 4
                 + 2 * 2 * _LANE * 4)
    inv_cols = 1.0 / float(cols)

    if nct == 1:
        partials = pl.pallas_call(
            functools.partial(_nse_single_kernel, cols=cols, inv_cols=inv_cols),
            out_shape=jax.ShapeDtypeStruct((nrt, 2, _LANE), jnp.float32),
            grid_spec=pltpu.PrefetchScalarGridSpec(
                num_scalar_prefetch=0,
                grid=(nrt,),
                in_specs=[
                    pl.BlockSpec((tr, tc), lambda i: (i, 0)),   # prediction
                    pl.BlockSpec((tr, tc), lambda i: (i, 0)),   # target
                ],
                out_specs=pl.BlockSpec((1, 2, _LANE), lambda i: (i, 0, 0)),
            ),
            compiler_params=pltpu.CompilerParams(
                dimension_semantics=("parallel",),
                vmem_limit_bytes=max(2 * vmem_need + (2 << 20), 16 << 20),
            ),
        )(pred2d, tgt2d)
    else:
        partials = pl.pallas_call(
            functools.partial(_nse_multi_kernel, inv_cols=inv_cols),
            out_shape=jax.ShapeDtypeStruct((nrt, 2, _LANE), jnp.float32),
            grid_spec=pltpu.PrefetchScalarGridSpec(
                num_scalar_prefetch=0,
                grid=(nrt, nct),
                in_specs=[
                    pl.BlockSpec((tr, tc), lambda i, j: (i, j)),  # prediction
                    pl.BlockSpec((tr, tc), lambda i, j: (i, j)),  # target
                ],
                out_specs=pl.BlockSpec((1, 2, _LANE), lambda i, j: (i, 0, 0)),
                scratch_shapes=[
                    pltpu.VMEM((tr, _LANE), jnp.float32),   # sum (t - o)^2 (folded)
                    pltpu.VMEM((tr, _LANE), jnp.float32),   # sum t         (folded)
                    pltpu.VMEM((tr, _LANE), jnp.float32),   # sum t^2       (folded)
                ],
            ),
            compiler_params=pltpu.CompilerParams(
                dimension_semantics=("parallel", "arbitrary"),
                vmem_limit_bytes=max(2 * vmem_need + (2 << 20), 16 << 20),
            ),
        )(pred2d, tgt2d)

    num_total = jnp.sum(partials[:, 0, 0])
    den_total = jnp.sum(partials[:, 1, 0])
    # Matches the PyTorch reference: no epsilon guard for a spatially-constant target.
    return num_total / den_total


def nse_loss_ref(output, target):
    t = target.astype(jnp.float32)
    o = output.astype(jnp.float32)
    t_mean = jnp.mean(t, axis=(2, 3), keepdims=True)
    return jnp.sum((t - o) ** 2) / jnp.sum((t - t_mean) ** 2)


if __name__ == "__main__":
    key = jax.random.PRNGKey(0)

    cases = [
        (2, 4, 16, 16),   # primary: single column tile, fully aligned
        (1, 3, 5, 7),     # single column tile, row+col zero-padding + lane mask
        (2, 8, 70, 70),   # multi column tile path (nct=2), 2 row tiles, padding
        (4, 8, 16, 16),   # single column tile, 2 row tiles ("parallel" axis)
    ]

    for idx, (N, C, H, W) in enumerate(cases):
        key, k1, k2 = jax.random.split(key, 3)
        output = jax.random.normal(k1, (N, C, H, W), dtype=jnp.float32)
        target = jax.random.normal(k2, (N, C, H, W), dtype=jnp.float32)

        loss = nse_loss(output, target)
        jax.block_until_ready(loss)
        ref = nse_loss_ref(output, target)
        assert jnp.allclose(loss, ref, rtol=1e-4, atol=1e-5), (idx, loss, ref)

    print("KERNEL_OK")
</pallas_src>

<mosaic_0001>
module attributes {stable_mosaic.version = 11 : i64} {
  func.func @_nse_single_kernel(%arg0: i32, %arg1: memref<8x256xf32, #tpu.memory_space<vmem>>, %arg2: memref<8x256xf32, #tpu.memory_space<vmem>>, %arg3: memref<1x2x128xf32, #tpu.memory_space<vmem>>) attributes {dimension_semantics = [#tpu.dimension_semantics<parallel>], iteration_bounds = array<i64: 1>, scalar_prefetch = 0 : i64, scratch_operands = 0 : i64, tpu.core_type = #tpu.core_type<tc>, window_params = [{transform_indices = @transform_0, window_bounds = array<i64: 8, 256>}, {transform_indices = @transform_1, window_bounds = array<i64: 8, 256>}, {transform_indices = @transform_2, window_bounds = array<i64: 1, 2, 128>}]} {
    %c0 = arith.constant 0 : index
    %c0_0 = arith.constant 0 : index
    %0 = vector.load %arg2[%c0, %c0_0] : memref<8x256xf32, #tpu.memory_space<vmem>>, vector<8x256xf32>
    %c0_1 = arith.constant 0 : index
    %c0_2 = arith.constant 0 : index
    %1 = vector.load %arg1[%c0_1, %c0_2] : memref<8x256xf32, #tpu.memory_space<vmem>>, vector<8x256xf32>
    %2 = arith.subf %0, %1 : vector<8x256xf32>
    %3 = arith.mulf %2, %2 : vector<8x256xf32>
    %4 = vector.shape_cast %3 : vector<8x256xf32> to vector<1x8x256xf32>
    %cst = arith.constant dense<0.000000e+00> : vector<1xf32>
    %5 = vector.multi_reduction <add>, %4, %cst [1, 2] : vector<1x8x256xf32> to vector<1xf32>
    %6 = vector.shape_cast %5 : vector<1xf32> to vector<1x1x1xf32>
    %7 = vector.extract %6[0, 0, 0] : f32 from vector<1x1x1xf32>
    %cst_3 = arith.constant dense<0.000000e+00> : vector<8xf32>
    %8 = vector.multi_reduction <add>, %0, %cst_3 [1] : vector<8x256xf32> to vector<8xf32>
    %9 = vector.shape_cast %8 : vector<8xf32> to vector<8x1xf32>
    %cst_4 = arith.constant 3.906250e-03 : f32
    %10 = vector.broadcast %cst_4 : f32 to vector<8x1xf32>
    %11 = arith.mulf %9, %10 : vector<8x1xf32>
    %12 = vector.broadcast %11 : vector<8x1xf32> to vector<8x256xf32>
    %13 = arith.subf %0, %12 : vector<8x256xf32>
    %14 = arith.mulf %13, %13 : vector<8x256xf32>
    %15 = vector.shape_cast %14 : vector<8x256xf32> to vector<1x8x256xf32>
    %cst_5 = arith.constant dense<0.000000e+00> : vector<1xf32>
    %16 = vector.multi_reduction <add>, %15, %cst_5 [1, 2] : vector<1x8x256xf32> to vector<1xf32>
    %17 = vector.shape_cast %16 : vector<1xf32> to vector<1x1x1xf32>
    %18 = vector.extract %17[0, 0, 0] : f32 from vector<1x1x1xf32>
    %19 = vector.broadcast %7 : f32 to vector<1x1x128xf32>
    %c0_6 = arith.constant 0 : index
    %c0_7 = arith.constant 0 : index
    %c0_8 = arith.constant 0 : index
    %20 = vector.load %arg3[%c0_6, %c0_7, %c0_8] : memref<1x2x128xf32, #tpu.memory_space<vmem>>, vector<1x1x128xf32>
    tpu.vector_store %arg3[%c0_6, %c0_7, %c0_8], %19 {strides = array<i32>} : memref<1x2x128xf32, #tpu.memory_space<vmem>>, vector<1x1x128xf32>,
    %21 = vector.broadcast %18 : f32 to vector<1x1x128xf32>
    %c0_9 = arith.constant 0 : index
    %c1 = arith.constant 1 : index
    %c0_10 = arith.constant 0 : index
    %22 = vector.load %arg3[%c0_9, %c1, %c0_10] : memref<1x2x128xf32, #tpu.memory_space<vmem>>, vector<1x1x128xf32>
    tpu.vector_store %arg3[%c0_9, %c1, %c0_10], %21 {strides = array<i32>} : memref<1x2x128xf32, #tpu.memory_space<vmem>>, vector<1x1x128xf32>,
    return
  }
  func.func @transform_0(%arg0: i32) -> (i32, i32) {
    %c0_i32 = arith.constant 0 : i32
    %c0_i32_0 = arith.constant 0 : i32
    return %arg0, %c0_i32 : i32, i32
  }
  func.func @transform_1(%arg0: i32) -> (i32, i32) {
    %c0_i32 = arith.constant 0 : i32
    %c0_i32_0 = arith.constant 0 : i32
    return %arg0, %c0_i32 : i32, i32
  }
  func.func @transform_2(%arg0: i32) -> (i32, i32, i32) {
    %c0_i32 = arith.constant 0 : i32
    %c0_i32_0 = arith.constant 0 : i32
    %c0_i32_1 = arith.constant 0 : i32
    return %arg0, %c0_i32, %c0_i32_0 : i32, i32, i32
  }
}

</mosaic_0001>

<llo_original>
// kernel: tpu_custom_call.1
$region0: #{tpu_custom_call.1}
  #allocation0 [shape = 'u32[]', space=smem, size = 0x4, offset = 0x4, fixed_abs, tag = 'smem constant byte address 0x4 - core index']
  #allocation1 [shape = 'u32[72,128]{1,0:T(1,128)}', space=vmem, size = 0x9000, scoped, tag = 'internal scratch']
  %s0 = inlined_call_operand.hbm [shape: f32[8,256], index: 0, kind: input, shape index: {}]
  %s1 = inlined_call_operand.hbm [shape: f32[8,256], index: 1, kind: input, shape index: {}]
  %s2 = inlined_call_operand.hbm [shape: f32[1,2,128], index: 2, kind: output, shape index: {}]
  %s3 = sld [smem:[#allocation0]]
  $region26: #{tpu_custom_call.1} parent=0
    _
  %s5 = ssub.s32 1, %s3
  %s6 = scalar_select 0, %s5, %s3
  $region1: #{tpu_custom_call.1} parent=0
    #allocation2 [shape = 'u8[8192]{0}', space=vmem, size = 0x2000, scoped, tag = 'input window, operand 0, single buffered']
    #allocation3 [shape = 's32[1]{0}', space=sflag, size = 0x4, scoped, tag = 'scoped memory for tpu_custom_call.1']
    #allocation4 [shape = 's32[1]{0}', space=sflag, size = 0x4, scoped, tag = 'scoped memory for tpu_custom_call.1']
    #allocation5 [shape = 'u8[8192]{0}', space=vmem, size = 0x2000, scoped, tag = 'input window, operand 1, single buffered']
    #allocation6 [shape = 's32[1]{0}', space=sflag, size = 0x4, scoped, tag = 'scoped memory for tpu_custom_call.1']
    #allocation7 [shape = 'u8[1024]{0}', space=vmem, size = 0x400, scoped, tag = 'output window, operand 0, single buffered']
    %7 = vsyncpa [#allocation3], 0
    %8 = vsyncpa [#allocation6], 0
    %9 = vsyncpa [#allocation4], 0
    // Predicated region
    $region2: #{tpu_custom_call.1} parent=1 // pred_check
      _
    $region3: #{tpu_custom_call.1} parent=1 // pred_check_branch
      %11 = sbr.rel (0) target = $region5
    $region4: #{tpu_custom_call.1} parent=1 // pred_region
      %13 = vsyncadd [#allocation3], 0
      %s15 = sshll.u32 %s0, 4
      %s16 = int_to_ptr.hbm [resolvable:$true] %s15
      %s17 = sshll.u32 [#allocation2], 4
      %s18 = int_to_ptr.vmem [resolvable:$true] %s17
      %20 = dma.hbm_to_vmem [thread:$0]  %s16, 256, %s18, [#allocation3]
    $region5: #{tpu_custom_call.1} parent=1 // pred_fallthru
      _
    // Predicated region
    $region6: #{tpu_custom_call.1} parent=1 // pred_check
      _
    $region7: #{tpu_custom_call.1} parent=1 // pred_check_branch
      %22 = sbr.rel (0) target = $region9
    $region8: #{tpu_custom_call.1} parent=1 // pred_region
      %24 = vsyncadd [#allocation6], 0
      %s26 = sshll.u32 %s1, 4
      %s27 = int_to_ptr.hbm [resolvable:$true] %s26
      %s28 = sshll.u32 [#allocation5], 4
      %s29 = int_to_ptr.vmem [resolvable:$true] %s28
      %31 = dma.hbm_to_vmem [thread:$0]  %s27, 256, %s29, [#allocation6]
    $region9: #{tpu_custom_call.1} parent=1 // pred_fallthru
      _
    // Predicated region
    $region10: #{tpu_custom_call.1} parent=1 // pred_check
      _
    $region11: #{tpu_custom_call.1} parent=1 // pred_check_branch
      %33 = sbr.rel (0) target = $region13
    $region12: #{tpu_custom_call.1} parent=1 // pred_region
      %35 = dma.done [#allocation3], 256
    $region13: #{tpu_custom_call.1} parent=1 // pred_fallthru
      _
    // Predicated region
    $region14: #{tpu_custom_call.1} parent=1 // pred_check
      _
    $region15: #{tpu_custom_call.1} parent=1 // pred_check_branch
      %37 = sbr.rel (0) target = $region17
    $region16: #{tpu_custom_call.1} parent=1 // pred_region
      %39 = dma.done [#allocation6], 256
    $region17: #{tpu_custom_call.1} parent=1 // pred_fallthru
      _
    %v40 = vld [vmem:[#allocation5] sm:$0xff]
    %v41 = vld [vmem:[#allocation5 + $0x8] sm:$0xff]
    %v42 = vld [vmem:[#allocation2] sm:$0xff]
    %v43 = vld [vmem:[#allocation2 + $0x8] sm:$0xff]
    %v44 = vsub.f32 %v40, %v42
    %v45 = vsub.f32 %v41, %v43
    %v46 = vmul.f32 %v44, %v44
    %v47 = vmul.f32 %v45, %v45
    %v48 = vadd.f32 %v46, %v47
    %49 = vadd.xlane.f32.xlu0 %v48
    %v50 = vpop.xlane.xlu0 %49
    %v51 = vrot.slane %v50, 4
    %v52 = vadd.f32 %v50, %v51
    %v53 = vrot.slane %v52, 2
    %v54 = vadd.f32 %v52, %v53
    %v55 = vrot.slane %v54, 1
    %v56 = vadd.f32 %v54, %v55
    %s57 = vtos %v56
    %v58 = vadd.f32 %v40, %v41
    %59 = vadd.xlane.f32.xlu0 %v58
    %v60 = vpop.xlane.xlu0 %59
    %v61 = vmul.f32 %v60, 0.00390625
    %v62 = vsub.f32 %v40, %v61
    %v63 = vsub.f32 %v41, %v61
    %v64 = vmul.f32 %v62, %v62
    %v65 = vmul.f32 %v63, %v63
    %v66 = vadd.f32 %v64, %v65
    %67 = vadd.xlane.f32.xlu0 %v66
    %v68 = vpop.xlane.xlu0 %67
    %v69 = vrot.slane %v68, 4
    %v70 = vadd.f32 %v68, %v69
    %v71 = vrot.slane %v70, 2
    %v72 = vadd.f32 %v70, %v71
    %v73 = vrot.slane %v72, 1
    %v74 = vadd.f32 %v72, %v73
    %s75 = vtos %v74
    %v76 = vstv %s57
    %77 = vst [vmem:[#allocation7] sm:$0x1] %v76
    %v78 = vstv %s75
    %79 = vst [vmem:[#allocation7 + $0x1] sm:$0x1] %v78
    // Predicated region
    $region18: #{tpu_custom_call.1} parent=1 // pred_check
      _
    $region19: #{tpu_custom_call.1} parent=1 // pred_check_branch
      %81 = sbr.rel (0) target = $region21
    $region20: #{tpu_custom_call.1} parent=1 // pred_region
      %83 = vsyncadd [#allocation4], 0
      %s85 = sshll.u32 [#allocation7], 4
      %s86 = int_to_ptr.vmem [resolvable:$true] %s85
      %s87 = sshll.u32 %s2, 4
      %s88 = int_to_ptr.hbm [resolvable:$true] %s87
      %90 = dma.vmem_to_hbm [thread:$0]  %s86, 32, %s88, [#allocation4]
    $region21: #{tpu_custom_call.1} parent=1 // pred_fallthru
      _
    // Predicated region
    $region22: #{tpu_custom_call.1} parent=1 // pred_check
      _
    $region23: #{tpu_custom_call.1} parent=1 // pred_check_branch
      %92 = sbr.rel (0) target = $region25
    $region24: #{tpu_custom_call.1} parent=1 // pred_region
      %94 = dma.done [#allocation4], 32
    $region25: #{tpu_custom_call.1} parent=1 // pred_fallthru
      _
    %95 = vsyncpa [#allocation3], 1
    %96 = vsyncpa [#allocation6], 1
    %97 = vsyncpa [#allocation4], 1

</llo_original>
